<compile_context>
chip_gen: v7x
topology: tpu7x:2x2x1
jax: 0.10.0
libtpu: 0.0.40
codegen_flags: <defaults>
</compile_context>

<pallas_src>
import math
import functools

import jax
import jax.numpy as jnp
from jax import lax
from jax.experimental import pallas as pl
from jax.experimental.pallas import tpu as pltpu


# ---------------------------------------------------------------------------
# Stateless hash PRNG (per-element, counter-based)
# ---------------------------------------------------------------------------
def _lowbias32(h):
    """Integer avalanche finalizer ("lowbias32"). uint32 in -> uint32 out."""
    h = h ^ (h >> 16)
    h = h * jnp.uint32(0x7FEB352D)
    h = h ^ (h >> 15)
    h = h * jnp.uint32(0x846CA68B)
    h = h ^ (h >> 16)
    return h


# ---------------------------------------------------------------------------
# Kernel
# ---------------------------------------------------------------------------
def _pe_dropout_kernel(seed_ref, x_ref, pe_ref, o_ref, *,
                       dropout_p, train, tile_s, s_padded, d_model):
    """One grid step = one (seq-tile, batch-element) pair.

    seed_ref : SMEM scalar-prefetch, shape (1,) int32
    x_ref    : VMEM block (tile_s, d_model)   (batch dim squeezed)
    pe_ref   : VMEM block (tile_s, d_model)   (resident across inner batch loop)
    o_ref    : VMEM block (tile_s, d_model)
    """
    y = x_ref[...].astype(jnp.float32) + pe_ref[...].astype(jnp.float32)

    if train and dropout_p > 0.0:
        s = pl.program_id(0)   # seq-tile index
        b = pl.program_id(1)   # batch index
        # Stateless PRNG: hash(seed, global element index). Each element of
        # the logical [B, S_pad, D] array gets its own stream regardless of
        # tiling or cross-core parallel execution.
        row = (lax.broadcasted_iota(jnp.int32, y.shape, 0)
               + s * tile_s).astype(jnp.uint32)
        col = lax.broadcasted_iota(jnp.int32, y.shape, 1).astype(jnp.uint32)
        idx = (b.astype(jnp.uint32) * jnp.uint32(s_padded) + row) \
              * jnp.uint32(d_model) + col
        seed = seed_ref[0].astype(jnp.uint32)
        h = _lowbias32(idx * jnp.uint32(0x9E3779B9)
                       + seed * jnp.uint32(0x85EBCA6B))
        # Inverted dropout: keep with prob 1 - round(p*2^32)/2^32 (sub-ULP
        # bias vs exact 1-p), scale kept values by 1/(1-p) -- matches
        # nn.Dropout's distributional semantics (mask bits differ from torch).
        threshold = jnp.uint32(min(int(round(dropout_p * 2.0 ** 32)),
                                   2 ** 32 - 1))
        keep = h >= threshold
        y = jnp.where(keep, y * (1.0 / (1.0 - dropout_p)), 0.0)

    o_ref[...] = y.astype(o_ref.dtype)


# ---------------------------------------------------------------------------
# Wrapper
# ---------------------------------------------------------------------------
def positional_encoding_forward(x, pe, *, dropout_p=0.1, train=True, seed=0):
    """x: [B, S, D]; pe: [max_len, D] (precomputed buffer, f32)."""
    B, S, D = x.shape
    itemsize = jnp.dtype(x.dtype).itemsize
    sub = 8 if itemsize >= 4 else 16      # f32 sublane 8, bf16 packed 16

    # ~2 MiB seq tiles: large enough to amortize per-step overhead, small
    # enough that double-buffered x + out + pe tiles (~6 live) fit v5e's
    # 16 MiB default scoped VMEM and v7x's 64 MiB physical VMEM easily.
    target_bytes = 2 << 20
    row_bytes = max(D * itemsize, 1)
    tS = max(sub, (target_bytes // row_bytes) // sub * sub)
    S_ceil = ((S + sub - 1) // sub) * sub
    tS = min(tS, S_ceil)
    S_pad = ((S + tS - 1) // tS) * tS
    num_s_tiles = S_pad // tS

    pe_s = pe[:S].astype(jnp.float32)
    if S_pad != S:
        x_in = jnp.pad(x, ((0, 0), (0, S_pad - S), (0, 0)))
        pe_s = jnp.pad(pe_s, ((0, S_pad - S), (0, 0)))
    else:
        x_in = x

    seed_arr = jnp.array([seed], dtype=jnp.int32)
    kernel = functools.partial(
        _pe_dropout_kernel,
        dropout_p=float(dropout_p), train=bool(train),
        tile_s=int(tS), s_padded=int(S_pad), d_model=int(D))

    out = pl.pallas_call(
        kernel,
        out_shape=jax.ShapeDtypeStruct((B, S_pad, D), x.dtype),
        grid_spec=pltpu.PrefetchScalarGridSpec(
            num_scalar_prefetch=1,            # seed lands in SMEM
            # batch is the innermost (fastest) axis -> pe tile stays resident
            # across the whole batch loop of each seq tile.
            grid=(num_s_tiles, B),
            in_specs=[
                pl.BlockSpec((None, tS, D), lambda s, b, seed: (b, s, 0)),  # x
                pl.BlockSpec((tS, D), lambda s, b, seed: (s, 0)),           # pe
            ],
            out_specs=pl.BlockSpec((None, tS, D), lambda s, b, seed: (b, s, 0)),
        ),
        compiler_params=pltpu.CompilerParams(
            # Stateless per-element hash -> no serial PRNG state -> both grid
            # axes can shard across TensorCores (2x on v7x megacore).
            dimension_semantics=("parallel", "parallel"),
        ),
    )(seed_arr, x_in, pe_s)

    if S_pad != S:
        out = out[:, :S, :]
    return out


# ---------------------------------------------------------------------------
# Buffer setup (deterministic, matches PositionalEncoding.__init__)
# ---------------------------------------------------------------------------
def make_pe_buffer(d_model: int, max_len: int = 4096) -> jnp.ndarray:
    position = jnp.arange(max_len, dtype=jnp.float32)[:, None]            # [L, 1]
    div_term = jnp.exp(
        jnp.arange(0, d_model, 2, dtype=jnp.float32)
        * (-math.log(10000.0) / d_model))                                 # [D/2]
    pe = jnp.zeros((max_len, d_model), dtype=jnp.float32)
    pe = pe.at[:, 0::2].set(jnp.sin(position * div_term))
    pe = pe.at[:, 1::2].set(jnp.cos(position * div_term))
    # (PyTorch stores [max_len, 1, d_model]; the singleton is only a
    #  broadcast axis, so we keep [max_len, d_model].)
    return pe


# ---------------------------------------------------------------------------
# Demo / self-check
# ---------------------------------------------------------------------------
if __name__ == "__main__":
    B, S, D = 2, 16, 128          # D = 128 -> lane-dense output blocks
    max_len = 64
    dropout_p = 0.1

    key = jax.random.PRNGKey(0)
    x = jax.random.normal(key, (B, S, D), dtype=jnp.float32)
    pe = make_pe_buffer(D, max_len)

    ref = x + pe[:S][None, :, :]

    # Eval-mode pass (dropout = identity): exact reference check.
    out_eval = positional_encoding_forward(x, pe, dropout_p=dropout_p, train=False)
    out_eval = jax.block_until_ready(out_eval)
    assert out_eval.shape == (B, S, D)
    assert jnp.allclose(out_eval, ref, atol=1e-6), "eval-mode mismatch"

    # Train-mode pass: every element is either exactly 0 (dropped) or equals
    # (x + pe) / (1 - p) (kept); drop fraction should be roughly p.
    out_train = positional_encoding_forward(
        x, pe, dropout_p=dropout_p, train=True, seed=123)
    out_train = jax.block_until_ready(out_train)
    assert out_train.shape == (B, S, D)
    scaled_ref = ref / (1.0 - dropout_p)
    elem_ok = (out_train == 0.0) | (jnp.abs(out_train - scaled_ref) < 1e-5)
    assert bool(jnp.all(elem_ok)), "train-mode dropout values mismatch"
    drop_frac = float(jnp.mean((out_train == 0.0).astype(jnp.float32)))
    assert 0.02 <= drop_frac <= 0.25, f"implausible drop fraction {drop_frac}"

    print("KERNEL_OK")
</pallas_src>

<mosaic_0001>
module attributes {stable_mosaic.version = 11 : i64} {
  func.func @_pe_dropout_kernel(%arg0: i32, %arg1: i32, %arg2: memref<1xi32, #tpu.memory_space<smem>>, %arg3: memref<1x16x128xf32, #tpu.memory_space<vmem>>, %arg4: memref<16x128xf32, #tpu.memory_space<vmem>>, %arg5: memref<1x16x128xf32, #tpu.memory_space<vmem>>) attributes {dimension_semantics = [#tpu.dimension_semantics<parallel>, #tpu.dimension_semantics<parallel>], iteration_bounds = array<i64: 1, 2>, scalar_prefetch = 1 : i64, scratch_operands = 0 : i64, tpu.core_type = #tpu.core_type<tc>, window_params = [{transform_indices = @transform_0, window_bounds = array<i64: 1, 16, 128>}, {transform_indices = @transform_1, window_bounds = array<i64: 16, 128>}, {transform_indices = @transform_2, window_bounds = array<i64: 1, 16, 128>}]} {
    %c0 = arith.constant 0 : index
    %c0_0 = arith.constant 0 : index
    %c0_1 = arith.constant 0 : index
    %0 = vector.load %arg3[%c0, %c0_0, %c0_1] : memref<1x16x128xf32, #tpu.memory_space<vmem>>, vector<1x16x128xf32>
    %1 = vector.shape_cast %0 : vector<1x16x128xf32> to vector<16x128xf32>
    %c0_2 = arith.constant 0 : index
    %c0_3 = arith.constant 0 : index
    %2 = vector.load %arg4[%c0_2, %c0_3] : memref<16x128xf32, #tpu.memory_space<vmem>>, vector<16x128xf32>
    %3 = arith.addf %1, %2 : vector<16x128xf32>
    %c0_4 = arith.constant 0 : index
    %c0_5 = arith.constant 0 : index
    %c0_6 = arith.constant 0 : index
    %4 = vector.load %arg5[%c0_4, %c0_5, %c0_6] : memref<1x16x128xf32, #tpu.memory_space<vmem>>, vector<1x16x128xf32>
    %5 = vector.shape_cast %4 : vector<1x16x128xf32> to vector<16x128xf32>
    %6 = vector.shape_cast %3 : vector<16x128xf32> to vector<1x16x128xf32>
    tpu.vector_store %arg5[%c0_4, %c0_5, %c0_6], %6 {strides = array<i32>} : memref<1x16x128xf32, #tpu.memory_space<vmem>>, vector<1x16x128xf32>,
    return
  }
  func.func @transform_0(%arg0: i32, %arg1: i32, %arg2: memref<1xi32, #tpu.memory_space<smem>>) -> (i32, i32, i32) {
    %c0_i32 = arith.constant 0 : i32
    %c0_i32_0 = arith.constant 0 : i32
    return %arg1, %arg0, %c0_i32 : i32, i32, i32
  }
  func.func @transform_1(%arg0: i32, %arg1: i32, %arg2: memref<1xi32, #tpu.memory_space<smem>>) -> (i32, i32) {
    %c0_i32 = arith.constant 0 : i32
    %c0_i32_0 = arith.constant 0 : i32
    return %arg0, %c0_i32 : i32, i32
  }
  func.func @transform_2(%arg0: i32, %arg1: i32, %arg2: memref<1xi32, #tpu.memory_space<smem>>) -> (i32, i32, i32) {
    %c0_i32 = arith.constant 0 : i32
    %c0_i32_0 = arith.constant 0 : i32
    return %arg1, %arg0, %c0_i32 : i32, i32, i32
  }
}

</mosaic_0001>

<llo_original>
// kernel: tpu_custom_call.1
$region0: #{tpu_custom_call.1}
  #allocation0 [shape = 'u32[]', space=smem, size = 0x4, offset = 0x4, fixed_abs, tag = 'smem constant byte address 0x4 - core index']
  #allocation1 [shape = 'u32[144,128]{1,0:T(1,128)}', space=vmem, size = 0x12000, scoped, tag = 'internal scratch']
  #allocation2 [shape = 's32[1]{0}', space=sflag, size = 0x4, scoped, tag = 'scoped memory for tpu_custom_call.1']
  #allocation3 [shape = 's32[1]{0:T(128)S(6)}', space=smem, size = 0x200, scoped, tag = 'prefetched SMEM operand 0']
  %s0 = inlined_call_operand.<no memory space> [shape: s32[1], index: 0, kind: input, shape index: {}]
  %s1 = inlined_call_operand.hbm [shape: f32[2,16,128], index: 1, kind: input, shape index: {}]
  %s2 = inlined_call_operand.hbm [shape: f32[16,128], index: 2, kind: input, shape index: {}]
  %s3 = inlined_call_operand.hbm [shape: f32[2,16,128], index: 3, kind: output, shape index: {}]
  %s4 = sld [smem:[#allocation0]]
  $region49: #{tpu_custom_call.1} parent=0
    _
  %s6 = ssub.s32 1, %s4
  %s7 = scalar_select 0, %s6, %s4
  %8 = sst [smem:[#allocation3]] %s0
  $region1: #{tpu_custom_call.1} parent=0
    #allocation4 [shape = 'u8[16384]{0}', space=vmem, size = 0x4000, scoped, tag = 'input window, operand 1']
    #allocation5 [shape = 's32[2]{0}', space=sflag, size = 0x8, scoped, tag = 'scoped memory for tpu_custom_call.1']
    #allocation6 [shape = 's32[2]{0}', space=sflag, size = 0x8, scoped, tag = 'scoped memory for tpu_custom_call.1']
    #allocation7 [shape = 'u8[8192]{0}', space=vmem, size = 0x2000, scoped, tag = 'input window, operand 2, single buffered']
    #allocation8 [shape = 's32[1]{0}', space=sflag, size = 0x4, scoped, tag = 'scoped memory for tpu_custom_call.1']
    #allocation9 [shape = 'u8[16384]{0}', space=vmem, size = 0x4000, scoped, tag = 'output window, operand 0']
    %9 = vsyncpa [#allocation5], 0
    %s10 = scalar_lea.sflag [#allocation5], 1
    %11 = vsyncpa %s10, 0
    %12 = vsyncpa [#allocation8], 0
    %13 = vsyncpa [#allocation6], 0
    %s14 = scalar_lea.sflag [#allocation6], 1
    %15 = vsyncpa %s14, 0
    loop: start=0, step=1, limit=4
    $region2: #{tpu_custom_call.1} parent=1 // loop_pre_header
      _
    $region3: #{tpu_custom_call.1} parent=1 // loop_header
      %s17 = sphi 0, %s21
      %p18 = scmp.ge.s32.totalorder %s17, 4
      %s24 = sphi 0, %s36
      %s25 = sphi 0, %s32
      %s26 = sphi 0, %s24
      %s27 = sphi 0, %s25
      %s28 = sphi 0, %s26
      %s29 = sphi 0, %s27
      %s41 = sphi 0, %s43
      %s44 = sphi 0, %s41
      %s45 = sphi 0, %s44
      %s61 = sphi 0, %s45
      %s67 = sphi 0, %s69
      %s70 = sphi 0, %s67
      %s71 = sphi 0, %s70
      %s87 = sphi 0, %s71
      %s95 = sphi 0, %s97
      %s98 = sphi 0, %s95
      %s99 = sphi 0, %s98
      %s115 = sphi 0, %s99
    $region4: #{tpu_custom_call.1} parent=1 // loop_header_branch
      %20 = sbr.rel (%p18) target = $region8
    $region5: #{tpu_custom_call.1} parent=1 // loop_body
      %s22 = ssub.s32 %s17, 1
      %s23 = ssub.s32 %s17, 2
      %s30 = sadd.s32 1, %s25
      %p31 = scmp.ge.s32.totalorder %s30, 2
      %s32 = scalar_select %p31, 0, %s30
      %s33 = sadd.s32 1, %s24
      %s34 = scalar_select %p31, %s33, %s24
      %p35 = scmp.ge.s32.totalorder %s34, 1
      %s36 = scalar_select %p35, 0, %s34
      %s37 = ssub.s32 %s25, %s32
      %s38 = ssub.s32 %s24, %s36
      %s39 = sor.u32 %s37, %s38
      %p40 = scmp.eq.s32.totalorder %s39, 0
      %s42 = sadd.s32 %s41, 1
      %s43 = scalar_select %p40, %s41, %s42
      %p46 = pneg %p40
      %p47 = scmp.eq.s32.totalorder %s17, 1
      %p48 = por %p46, %p47
      %p49 = scmp.ne.s32.totalorder %s41, %s44
      %p50 = scmp.eq.s32.totalorder %s17, 0
      %p51 = por %p49, %p50
      %p52 = scmp.ne.s32.totalorder %s41, %s44
      %p53 = scmp.eq.s32.totalorder %s22, 1
      %p54 = por %p52, %p53
      %p55 = scmp.ne.s32.totalorder %s44, %s45
      %p56 = scmp.eq.s32.totalorder %s22, 0
      %p57 = por %p55, %p56
      %p58 = scmp.ne.s32.totalorder %s44, %s45
      %p59 = scmp.eq.s32.totalorder %s23, 1
      %p60 = por %p58, %p59
      %p62 = scmp.ne.s32.totalorder %s45, %s61
      %p63 = scmp.eq.s32.totalorder %s23, 0
      %p64 = por %p62, %p63
      %s65 = ssub.s32 %s24, %s36
      %p66 = scmp.eq.s32.totalorder %s65, 0
      %s68 = sadd.s32 %s67, 1
      %s69 = scalar_select %p66, %s67, %s68
      %p72 = pneg %p66
      %p73 = scmp.eq.s32.totalorder %s17, 1
      %p74 = por %p72, %p73
      %p75 = scmp.ne.s32.totalorder %s67, %s70
      %p76 = scmp.eq.s32.totalorder %s17, 0
      %p77 = por %p75, %p76
      %p78 = scmp.ne.s32.totalorder %s67, %s70
      %p79 = scmp.eq.s32.totalorder %s22, 1
      %p80 = por %p78, %p79
      %p81 = scmp.ne.s32.totalorder %s70, %s71
      %p82 = scmp.eq.s32.totalorder %s22, 0
      %p83 = por %p81, %p82
      %p84 = scmp.ne.s32.totalorder %s70, %s71
      %p85 = scmp.eq.s32.totalorder %s23, 1
      %p86 = por %p84, %p85
      %p88 = scmp.ne.s32.totalorder %s71, %s87
      %p89 = scmp.eq.s32.totalorder %s23, 0
      %p90 = por %p88, %p89
      %s91 = ssub.s32 %s25, %s32
      %s92 = ssub.s32 %s24, %s36
      %s93 = sor.u32 %s91, %s92
      %p94 = scmp.eq.s32.totalorder %s93, 0
      %s96 = sadd.s32 %s95, 1
      %s97 = scalar_select %p94, %s95, %s96
      %p100 = pneg %p94
      %p101 = scmp.eq.s32.totalorder %s17, 1
      %p102 = por %p100, %p101
      %p103 = scmp.ne.s32.totalorder %s95, %s98
      %p104 = scmp.eq.s32.totalorder %s17, 0
      %p105 = por %p103, %p104
      %p106 = scmp.ne.s32.totalorder %s95, %s98
      %p107 = scmp.eq.s32.totalorder %s22, 1
      %p108 = por %p106, %p107
      %p109 = scmp.ne.s32.totalorder %s98, %s99
      %p110 = scmp.eq.s32.totalorder %s22, 0
      %p111 = por %p109, %p110
      %p112 = scmp.ne.s32.totalorder %s98, %s99
      %p113 = scmp.eq.s32.totalorder %s23, 1
      %p114 = por %p112, %p113
      %p116 = scmp.ne.s32.totalorder %s99, %s115
      %p117 = scmp.eq.s32.totalorder %s23, 0
      %p118 = por %p116, %p117
      %p119 = scmp.le.s32.totalorder 1, %s17
      %p120 = scmp.lt.s32.totalorder %s17, 3
      %p121 = pnand %p119, %p120
      %p122 = pneg %p121
      // Predicated region
      $region9: #{tpu_custom_call.1} parent=5 // pred_check
        _
      $region10: #{tpu_custom_call.1} parent=5 // pred_check_branch
        %124 = sbr.rel (%p121) target = $region12
      $region11: #{tpu_custom_call.1} parent=5 // pred_region
        %s125 = ssub.s32 %s17, 1
        // Predicated region
        $region13: #{tpu_custom_call.1} parent=11 // pred_check
          %p126 = pneg %p83
        $region14: #{tpu_custom_call.1} parent=11 // pred_check_branch
          %128 = sbr.rel (%p126) target = $region16
        $region15: #{tpu_custom_call.1} parent=11 // pred_region
          %s129 = smul.u32 2, %s26
          %s131 = ssub.s32 256, 256
          %132 = vsyncadd [#allocation8], %s131
          %s133 = smul.addr %s129, 128
          %s134 = scalar_lea.hbm %s2, %s133
          %s135 = sshll.u32 [#allocation7], 4
          %s136 = int_to_ptr.vmem [resolvable:$true] %s135
          %141 = dma.hbm_to_vmem [thread:$0]  %s134, 256, %s136, [#allocation8], 128, 128, 8
        $region16: #{tpu_custom_call.1} parent=11 // pred_fallthru
          _
      $region12: #{tpu_custom_call.1} parent=5 // pred_fallthru
        _
      %p142 = scmp.lt.s32.totalorder %s17, 2
      // Predicated region
      $region17: #{tpu_custom_call.1} parent=5 // pred_check
        %p143 = pneg %p142
      $region18: #{tpu_custom_call.1} parent=5 // pred_check_branch
        %145 = sbr.rel (%p143) target = $region20
      $region19: #{tpu_custom_call.1} parent=5 // pred_region
        // Predicated region
        $region21: #{tpu_custom_call.1} parent=19 // pred_check
          %p146 = pneg %p51
        $region22: #{tpu_custom_call.1} parent=19 // pred_check_branch
          %148 = sbr.rel (%p146) target = $region24
        $region23: #{tpu_custom_call.1} parent=19 // pred_region
          %s149 = sand.u32 %s41, 1
          %s150 = scalar_lea.sflag [#allocation5], %s149
          %s151 = sand.u32 %s41, 1
          %s152 = smul.addr %s151, 16
          %s153 = scalar_lea.vmem [#allocation4], %s152
          %s154 = smul.u32 2, %s24
          %s156 = ssub.s32 256, 256
          %157 = vsyncadd %s150, %s156
          %s158 = smul.addr %s25, 2
          %s159 = sadd.s32 %s154, %s158
          %s160 = smul.addr %s159, 128
          %s161 = scalar_lea.hbm %s1, %s160
          %s162 = sshll.u32 %s153, 4
          %s163 = int_to_ptr.vmem [resolvable:$true] %s162
          %168 = dma.hbm_to_vmem [thread:$0]  %s161, 256, %s163, %s150, 128, 128, 8
        $region24: #{tpu_custom_call.1} parent=19 // pred_fallthru
          _
      $region20: #{tpu_custom_call.1} parent=5 // pred_fallthru
        _
      %p169 = scmp.le.s32.totalorder 1, %s17
      %p170 = scmp.lt.s32.totalorder %s17, 3
      %p171 = pnand %p169, %p170
      %p172 = pneg %p171
      // Predicated region
      $region25: #{tpu_custom_call.1} parent=5 // pred_check
        _
      $region26: #{tpu_custom_call.1} parent=5 // pred_check_branch
        %174 = sbr.rel (%p171) target = $region28
      $region27: #{tpu_custom_call.1} parent=5 // pred_region
        %s175 = ssub.s32 %s17, 1
        %s176 = sand.u32 %s44, 1
        %s177 = scalar_lea.sflag [#allocation5], %s176
        %s178 = sand.u32 %s44, 1
        %s179 = smul.addr %s178, 16
        %s180 = scalar_lea.vmem [#allocation4], %s179
        // Predicated region
        $region29: #{tpu_custom_call.1} parent=27 // pred_check
          %p181 = pneg %p57
        $region30: #{tpu_custom_call.1} parent=27 // pred_check_branch
          %183 = sbr.rel (%p181) target = $region32
        $region31: #{tpu_custom_call.1} parent=27 // pred_region
          %184 = dma.done %s177, 256
        $region32: #{tpu_custom_call.1} parent=27 // pred_fallthru
          _
        // Predicated region
        $region33: #{tpu_custom_call.1} parent=27 // pred_check
          %p185 = pneg %p83
        $region34: #{tpu_custom_call.1} parent=27 // pred_check_branch
          %187 = sbr.rel (%p185) target = $region36
        $region35: #{tpu_custom_call.1} parent=27 // pred_region
          %188 = dma.done [#allocation8], 256
        $region36: #{tpu_custom_call.1} parent=27 // pred_fallthru
          _
        %s189 = sand.u32 %s44, 1
        %s190 = scalar_lea.sflag [#allocation5], %s189
        %s191 = sand.u32 %s44, 1
        %s192 = smul.addr %s191, 16
        %s193 = scalar_lea.vmem [#allocation4], %s192
        %p194 = pneg %p57
        %p195 = pneg %p54
        %p196 = pneg %p83
        %p197 = pneg %p80
        %p198 = pneg %p111
        %p199 = pneg %p108
        %s200 = sand.u32 %s98, 1
        %s201 = scalar_lea.sflag [#allocation6], %s200
        %s202 = sand.u32 %s98, 1
        %s203 = smul.addr %s202, 16
        %s204 = scalar_lea.vmem [#allocation9], %s203
        %s205 = smul.u32 2, %s26
        %s206 = smul.u32 2, %s26
        %s207 = smul.u32 2, %s26
        %v208 = vld [vmem:[%s180] sm:$0xff]
        %v209 = vld [vmem:[%s180 + $0x8] sm:$0xff]
        %v210 = vld [vmem:[#allocation7] sm:$0xff]
        %v211 = vld [vmem:[#allocation7 + $0x8] sm:$0xff]
        %v212 = vadd.f32 %v208, %v210
        %v213 = vadd.f32 %v209, %v211
        %214 = vst [vmem:[%s204] sm:$0xff] %v212
        %215 = vst [vmem:[%s204 + $0x8] sm:$0xff] %v213
        %s216 = sand.u32 %s98, 1
        %s217 = scalar_lea.sflag [#allocation6], %s216
        %s218 = sand.u32 %s98, 1
        %s219 = smul.addr %s218, 16
        %s220 = scalar_lea.vmem [#allocation9], %s219
        // Predicated region
        $region37: #{tpu_custom_call.1} parent=27 // pred_check
          %p221 = pneg %p108
        $region38: #{tpu_custom_call.1} parent=27 // pred_check_branch
          %223 = sbr.rel (%p221) target = $region40
        $region39: #{tpu_custom_call.1} parent=27 // pred_region
          %s224 = smul.u32 2, %s26
          %s226 = ssub.s32 256, 256
          %227 = vsyncadd %s217, %s226
          %s228 = smul.addr %s27, 2
          %s229 = sadd.s32 %s224, %s228
          %s230 = smul.addr %s229, 128
          %s231 = scalar_lea.hbm %s3, %s230
          %s232 = sshll.u32 %s220, 4
          %s233 = int_to_ptr.vmem [resolvable:$true] %s232
          %238 = dma.vmem_to_hbm [thread:$0]  %s233, 256, %s231, %s217, 128, 128, 8
        $region40: #{tpu_custom_call.1} parent=27 // pred_fallthru
          _
      $region28: #{tpu_custom_call.1} parent=5 // pred_fallthru
        _
      %p239 = scmp.le.s32.totalorder 2, %s17
      // Predicated region
      $region41: #{tpu_custom_call.1} parent=5 // pred_check
        %p240 = pneg %p239
      $region42: #{tpu_custom_call.1} parent=5 // pred_check_branch
        %242 = sbr.rel (%p240) target = $region44
      $region43: #{tpu_custom_call.1} parent=5 // pred_region
        %s243 = ssub.s32 %s17, 2
        // Predicated region
        $region45: #{tpu_custom_call.1} parent=43 // pred_check
          %p244 = pneg %p114
        $region46: #{tpu_custom_call.1} parent=43 // pred_check_branch
          %246 = sbr.rel (%p244) target = $region48
        $region47: #{tpu_custom_call.1} parent=43 // pred_region
          %s247 = sand.u32 %s99, 1
          %s248 = scalar_lea.sflag [#allocation6], %s247
          %s249 = sand.u32 %s99, 1
          %s250 = smul.addr %s249, 16
          %s251 = scalar_lea.vmem [#allocation9], %s250
          %252 = dma.done %s248, 256
        $region48: #{tpu_custom_call.1} parent=43 // pred_fallthru
          _
      $region44: #{tpu_custom_call.1} parent=5 // pred_fallthru
        _
    $region6: #{tpu_custom_call.1} parent=1 // loop_footer
      %s21 = sadd.s32 1, %s17
    $region7: #{tpu_custom_call.1} parent=1 // loop_footer_branch
      %16 = sbr.rel target = $region3
    $region8: #{tpu_custom_call.1} parent=1 // loop_exit
      _
    %253 = vsyncpa [#allocation5], 1
    %s254 = scalar_lea.sflag [#allocation5], 1
    %255 = vsyncpa %s254, 1
    %256 = vsyncpa [#allocation8], 1
    %257 = vsyncpa [#allocation6], 1
    %s258 = scalar_lea.sflag [#allocation6], 1
    %259 = vsyncpa %s258, 1

</llo_original>
